<compile_context>
chip_gen: v7x
topology: tpu7x:2x2x1
jax: 0.10.0
libtpu: 0.0.40
codegen_flags: <defaults>
</compile_context>

<pallas_src>
import jax
import jax.numpy as jnp
from jax.experimental import pallas as pl
from jax.experimental.pallas import tpu as pltpu


def _round_up(x, m):
    return ((x + m - 1) // m) * m


def _choose_tb(batch, max_tb=512):
    """Adaptive batch tile.

    - tiny batches: one 8-aligned tile (no wasted MXU rows),
    - moderate batches: two ~equal 8-aligned tiles so the 'parallel' grid axis can shard across
      v7x's two TensorCores,
    - large batches: 256-aligned tiles (v6e/v7x 256-wide MXU) up to max_tb to amortize the
      per-grid-step pipeline overhead.
    """
    if batch <= 32:
        return _round_up(batch, 8)
    if batch <= 256:
        return _round_up((batch + 1) // 2, 8)
    return min(max_tb, _round_up((batch + 1) // 2, 256))


def _vmem_limit_bytes(tb, Dt, C_pad, kp):
    """Rough VMEM budget: single-buffered weights + double-buffered x/out tiles + live f32
    intermediates, with 25% headroom; clamped to [16 MiB, 48 MiB] (safe on all generations)."""
    weight_bytes = sum(int(v.size) * v.dtype.itemsize for v in kp.values())
    H2 = int(kp["w1"].shape[1])
    stream_bytes = 2 * tb * Dt * 4 + 2 * tb * C_pad * 4
    act_bytes = 4 * tb * H2 * 4
    est = weight_bytes + stream_bytes + act_bytes
    return int(min(max(est * 5 // 4, 16 * 1024 * 1024), 48 * 1024 * 1024))


# ----------------------------------------------------------------------------
# Kernel: 5 chained matmuls (bf16 MXU inputs, f32 accumulation) with bias + ReLU
# between them.  BN is pre-folded into the weights/biases, Dropout is identity.
# ----------------------------------------------------------------------------
def _fused_mlp_kernel(x_ref,
                      w0_ref, b0_ref,     # text_proj (+BN0 folded): (Dt, H), (1, H)
                      w1_ref, b1_ref,     # Linear1   (+BN1 folded): (H, 2H), (1, 2H)
                      w2_ref, b2_ref,     # Linear2   (+BN2 folded): (2H, 2H), (1, 2H)
                      w3_ref, b3_ref,     # Linear3   (+BN3 folded): (2H, H), (1, H)
                      w4_ref, b4_ref,     # Linear4 (lane-padded):   (H, Cpad), (1, Cpad)
                      o_ref):             # logits: (TB, Cpad) f32
    h = x_ref[...].astype(jnp.bfloat16)   # in-kernel cast (VPU), hidden under MXU work
    h = jnp.dot(h, w0_ref[...], preferred_element_type=jnp.float32) + b0_ref[...]
    h = jnp.maximum(h, 0.0).astype(jnp.bfloat16)                              # (TB, H)
    h = jnp.dot(h, w1_ref[...], preferred_element_type=jnp.float32) + b1_ref[...]
    h = jnp.maximum(h, 0.0).astype(jnp.bfloat16)                              # (TB, 2H)
    h = jnp.dot(h, w2_ref[...], preferred_element_type=jnp.float32) + b2_ref[...]
    h = jnp.maximum(h, 0.0).astype(jnp.bfloat16)                              # (TB, 2H)
    h = jnp.dot(h, w3_ref[...], preferred_element_type=jnp.float32) + b3_ref[...]
    h = jnp.maximum(h, 0.0).astype(jnp.bfloat16)                              # (TB, H)
    o_ref[...] = jnp.dot(h, w4_ref[...], preferred_element_type=jnp.float32) + b4_ref[...]


# ----------------------------------------------------------------------------
# Wrapper: batch-gridded pallas_call, weights single-buffered & fully VMEM-resident,
# x / logits streaming with automatic double-buffering and masked boundary tiles.
# ----------------------------------------------------------------------------
def text_only_classifier_forward(text_emb, kp, *, num_classes, max_tb=512):
    B, Dt = text_emb.shape
    C_pad = int(kp["w4"].shape[1])
    tb = _choose_tb(B, max_tb)
    grid = (pl.cdiv(B, tb),)

    weights = (kp["w0"], kp["b0"], kp["w1"], kp["b1"], kp["w2"], kp["b2"],
               kp["w3"], kp["b3"], kp["w4"], kp["b4"])

    row_map = lambda i: (i, 0)                                        # streamed per batch tile
    vmem_full = pl.BlockSpec(memory_space=pltpu.MemorySpace.VMEM)     # whole array, 1 buffer

    in_specs = [pl.BlockSpec((tb, Dt), row_map)] + [vmem_full] * len(weights)
    out_specs = pl.BlockSpec((tb, C_pad), row_map)

    flops = 2 * B * sum(int(kp[k].shape[0]) * int(kp[k].shape[1])
                        for k in ("w0", "w1", "w2", "w3", "w4"))
    param_bytes = sum(int(w.size) * w.dtype.itemsize for w in weights)
    bytes_accessed = (int(text_emb.size) * text_emb.dtype.itemsize
                      + param_bytes + B * C_pad * 4)
    cost = pl.CostEstimate(flops=flops, bytes_accessed=bytes_accessed, transcendentals=0)

    out = pl.pallas_call(
        _fused_mlp_kernel,
        out_shape=jax.ShapeDtypeStruct((B, C_pad), jnp.float32),
        grid=grid,
        in_specs=in_specs,
        out_specs=out_specs,
        compiler_params=pltpu.CompilerParams(
            dimension_semantics=("parallel",),        # shards batch tiles across TCs on v7x
            vmem_limit_bytes=_vmem_limit_bytes(tb, Dt, C_pad, kp),
        ),
        cost_estimate=cost,
    )(text_emb, *weights)

    return out[:, :num_classes]


# ----------------------------------------------------------------------------
# Deterministic synthetic parameters mirroring the PyTorch module layout.
# ----------------------------------------------------------------------------
def make_torch_params(key, text_dim, hidden_dim, num_classes):
    H, H2 = hidden_dim, hidden_dim * 2
    ks = iter(jax.random.split(key, 32))

    def linear(din, dout):
        # PyTorch nn.Linear stores weight as (out, in).
        w = jax.random.normal(next(ks), (dout, din), jnp.float32) / jnp.sqrt(float(din))
        b = 0.1 * jax.random.normal(next(ks), (dout,), jnp.float32)
        return w, b

    def bn(dim):
        return dict(
            gamma=1.0 + 0.1 * jax.random.normal(next(ks), (dim,), jnp.float32),
            beta=0.1 * jax.random.normal(next(ks), (dim,), jnp.float32),
            mean=0.1 * jax.random.normal(next(ks), (dim,), jnp.float32),
            var=1.0 + 0.1 * jnp.abs(jax.random.normal(next(ks), (dim,), jnp.float32)),
        )

    p = {}
    p["proj_w"], p["proj_b"] = linear(text_dim, H)
    p["bn0"] = bn(H)
    p["w1"], p["b1"] = linear(H, H2)
    p["bn1"] = bn(H2)
    p["w2"], p["b2"] = linear(H2, H2)
    p["bn2"] = bn(H2)
    p["w3"], p["b3"] = linear(H2, H)
    p["bn3"] = bn(H)
    p["w4"], p["b4"] = linear(H, num_classes)
    return p


def fold_params(p, num_classes, eps=1e-5):
    """Fold each eval-mode BN into the preceding Linear; transpose to (in, out); cast weights bf16."""
    def fold(w, b, bn):
        s = bn["gamma"] / jnp.sqrt(bn["var"] + eps)
        t = bn["beta"] - bn["mean"] * s
        wf = (w.T * s[None, :]).astype(jnp.bfloat16)           # (in, out), columns scaled
        bf = (b * s + t).reshape(1, -1).astype(jnp.float32)
        return wf, bf

    kp = {}
    kp["w0"], kp["b0"] = fold(p["proj_w"], p["proj_b"], p["bn0"])
    kp["w1"], kp["b1"] = fold(p["w1"], p["b1"], p["bn1"])
    kp["w2"], kp["b2"] = fold(p["w2"], p["b2"], p["bn2"])
    kp["w3"], kp["b3"] = fold(p["w3"], p["b3"], p["bn3"])

    H = p["w4"].shape[1]
    C = num_classes
    C_pad = _round_up(C, 128)                                   # lane-dense output
    w4 = jnp.zeros((H, C_pad), jnp.float32).at[:, :C].set(p["w4"].T)
    b4 = jnp.zeros((1, C_pad), jnp.float32).at[:, :C].set(p["b4"])
    kp["w4"] = w4.astype(jnp.bfloat16)
    kp["b4"] = b4
    return kp


def reference_forward(x, p, eps=1e-5):
    """Pure-JAX f32 reference of TextOnlyClassifier eval-mode forward (unfolded params)."""
    def bn_relu(h, bn):
        s = bn["gamma"] / jnp.sqrt(bn["var"] + eps)
        return jnp.maximum((h - bn["mean"]) * s + bn["beta"], 0.0)

    h = x @ p["proj_w"].T + p["proj_b"]
    h = bn_relu(h, p["bn0"])
    h = h @ p["w1"].T + p["b1"]
    h = bn_relu(h, p["bn1"])
    h = h @ p["w2"].T + p["b2"]
    h = bn_relu(h, p["bn2"])
    h = h @ p["w3"].T + p["b3"]
    h = bn_relu(h, p["bn3"])
    return h @ p["w4"].T + p["b4"]


if __name__ == "__main__":
    # Small shapes consistent with the module (defaults are text_dim=768, hidden_dim=512, C=3);
    # scaled down but kept as lane multiples of 128.
    text_dim = 256
    hidden_dim = 128      # -> 2H = 256
    num_classes = 3

    key = jax.random.PRNGKey(0)
    k_x, k_p, k_x2 = jax.random.split(key, 3)

    raw = make_torch_params(k_p, text_dim, hidden_dim, num_classes)
    kp = fold_params(raw, num_classes)

    # ---- small-batch path: single adaptive tile (tb=16, no wasted MXU rows) ----
    batch = 16
    text_emb = jax.random.normal(k_x, (batch, text_dim), jnp.float32)
    out = text_only_classifier_forward(text_emb, kp, num_classes=num_classes)
    out = jax.block_until_ready(out)

    ref = reference_forward(text_emb, raw)
    assert out.shape == (batch, num_classes)
    max_diff = float(jnp.max(jnp.abs(out - ref)))
    # Loosened tolerance: matmul operands are bf16 (f32 accumulation) vs the pure-f32 reference.
    assert jnp.allclose(out, ref, atol=1e-1, rtol=1e-1), f"mismatch (max |diff|={max_diff})"

    # ---- moderate batch, non-multiple of tile: exercises >=2 grid steps (v7x megacore)
    #      and the masked partial boundary tile (no wrapper-side padding anymore) ----
    batch2 = 200
    text_emb2 = jax.random.normal(k_x2, (batch2, text_dim), jnp.float32)
    out2 = jax.block_until_ready(
        text_only_classifier_forward(text_emb2, kp, num_classes=num_classes))
    ref2 = reference_forward(text_emb2, raw)
    assert out2.shape == (batch2, num_classes)
    max_diff2 = float(jnp.max(jnp.abs(out2 - ref2)))
    assert jnp.allclose(out2, ref2, atol=1e-1, rtol=1e-1), f"mismatch (max |diff|={max_diff2})"

    print("KERNEL_OK")
</pallas_src>

<mosaic_0001>
module attributes {stable_mosaic.version = 11 : i64} {
  func.func @_fused_mlp_kernel(%arg0: i32, %arg1: memref<16x256xf32, #tpu.memory_space<vmem>>, %arg2: memref<256x128xbf16, #tpu.memory_space<vmem>>, %arg3: memref<1x128xf32, #tpu.memory_space<vmem>>, %arg4: memref<128x256xbf16, #tpu.memory_space<vmem>>, %arg5: memref<1x256xf32, #tpu.memory_space<vmem>>, %arg6: memref<256x256xbf16, #tpu.memory_space<vmem>>, %arg7: memref<1x256xf32, #tpu.memory_space<vmem>>, %arg8: memref<256x128xbf16, #tpu.memory_space<vmem>>, %arg9: memref<1x128xf32, #tpu.memory_space<vmem>>, %arg10: memref<128x128xbf16, #tpu.memory_space<vmem>>, %arg11: memref<1x128xf32, #tpu.memory_space<vmem>>, %arg12: memref<16x128xf32, #tpu.memory_space<vmem>>) attributes {dimension_semantics = [#tpu.dimension_semantics<parallel>], iteration_bounds = array<i64: 1>, scalar_prefetch = 0 : i64, scratch_operands = 0 : i64, tpu.core_type = #tpu.core_type<tc>, window_params = [{transform_indices = @transform_0, window_bounds = array<i64: 16, 256>}, {pipeline_mode = #tpu.pipeline_mode<synchronous>, transform_indices = @transform_1, window_bounds = array<i64: 256, 128>}, {pipeline_mode = #tpu.pipeline_mode<synchronous>, transform_indices = @transform_2, window_bounds = array<i64: 1, 128>}, {pipeline_mode = #tpu.pipeline_mode<synchronous>, transform_indices = @transform_3, window_bounds = array<i64: 128, 256>}, {pipeline_mode = #tpu.pipeline_mode<synchronous>, transform_indices = @transform_4, window_bounds = array<i64: 1, 256>}, {pipeline_mode = #tpu.pipeline_mode<synchronous>, transform_indices = @transform_5, window_bounds = array<i64: 256, 256>}, {pipeline_mode = #tpu.pipeline_mode<synchronous>, transform_indices = @transform_6, window_bounds = array<i64: 1, 256>}, {pipeline_mode = #tpu.pipeline_mode<synchronous>, transform_indices = @transform_7, window_bounds = array<i64: 256, 128>}, {pipeline_mode = #tpu.pipeline_mode<synchronous>, transform_indices = @transform_8, window_bounds = array<i64: 1, 128>}, {pipeline_mode = #tpu.pipeline_mode<synchronous>, transform_indices = @transform_9, window_bounds = array<i64: 128, 128>}, {pipeline_mode = #tpu.pipeline_mode<synchronous>, transform_indices = @transform_10, window_bounds = array<i64: 1, 128>}, {transform_indices = @transform_11, window_bounds = array<i64: 16, 128>}]} {
    %c0 = arith.constant 0 : index
    %c0_0 = arith.constant 0 : index
    %0 = vector.load %arg1[%c0, %c0_0] : memref<16x256xf32, #tpu.memory_space<vmem>>, vector<16x256xf32>
    %1 = arith.truncf %0 : vector<16x256xf32> to vector<16x256xbf16>
    %c0_1 = arith.constant 0 : index
    %c0_2 = arith.constant 0 : index
    %2 = vector.load %arg2[%c0_1, %c0_2] : memref<256x128xbf16, #tpu.memory_space<vmem>>, vector<256x128xbf16>
    %cst = arith.constant dense<0.000000e+00> : vector<16x128xf32>
    %3 = tpu.matmul %1, %2, %cst {dimension_numbers = #tpu.dot_dimension_numbers<[1], [0], [0], [1], [0, 0, 1, 1], [], []>} : vector<16x256xbf16>, vector<256x128xbf16>, vector<16x128xf32> -> vector<16x128xf32>
    %c0_3 = arith.constant 0 : index
    %c0_4 = arith.constant 0 : index
    %4 = vector.load %arg3[%c0_3, %c0_4] : memref<1x128xf32, #tpu.memory_space<vmem>>, vector<1x128xf32>
    %5 = vector.broadcast %4 : vector<1x128xf32> to vector<16x128xf32>
    %6 = arith.addf %3, %5 : vector<16x128xf32>
    %cst_5 = arith.constant 0.000000e+00 : f32
    %7 = vector.broadcast %cst_5 : f32 to vector<16x128xf32>
    %8 = arith.maximumf %6, %7 : vector<16x128xf32>
    %9 = arith.truncf %8 : vector<16x128xf32> to vector<16x128xbf16>
    %c0_6 = arith.constant 0 : index
    %c0_7 = arith.constant 0 : index
    %10 = vector.load %arg4[%c0_6, %c0_7] : memref<128x256xbf16, #tpu.memory_space<vmem>>, vector<128x256xbf16>
    %cst_8 = arith.constant dense<0.000000e+00> : vector<16x256xf32>
    %11 = tpu.matmul %9, %10, %cst_8 {dimension_numbers = #tpu.dot_dimension_numbers<[1], [0], [0], [1], [0, 0, 1, 1], [], []>} : vector<16x128xbf16>, vector<128x256xbf16>, vector<16x256xf32> -> vector<16x256xf32>
    %c0_9 = arith.constant 0 : index
    %c0_10 = arith.constant 0 : index
    %12 = vector.load %arg5[%c0_9, %c0_10] : memref<1x256xf32, #tpu.memory_space<vmem>>, vector<1x256xf32>
    %13 = vector.broadcast %12 : vector<1x256xf32> to vector<16x256xf32>
    %14 = arith.addf %11, %13 : vector<16x256xf32>
    %cst_11 = arith.constant 0.000000e+00 : f32
    %15 = vector.broadcast %cst_11 : f32 to vector<16x256xf32>
    %16 = arith.maximumf %14, %15 : vector<16x256xf32>
    %17 = arith.truncf %16 : vector<16x256xf32> to vector<16x256xbf16>
    %c0_12 = arith.constant 0 : index
    %c0_13 = arith.constant 0 : index
    %18 = vector.load %arg6[%c0_12, %c0_13] : memref<256x256xbf16, #tpu.memory_space<vmem>>, vector<256x256xbf16>
    %cst_14 = arith.constant dense<0.000000e+00> : vector<16x256xf32>
    %19 = tpu.matmul %17, %18, %cst_14 {dimension_numbers = #tpu.dot_dimension_numbers<[1], [0], [0], [1], [0, 0, 1, 1], [], []>} : vector<16x256xbf16>, vector<256x256xbf16>, vector<16x256xf32> -> vector<16x256xf32>
    %c0_15 = arith.constant 0 : index
    %c0_16 = arith.constant 0 : index
    %20 = vector.load %arg7[%c0_15, %c0_16] : memref<1x256xf32, #tpu.memory_space<vmem>>, vector<1x256xf32>
    %21 = vector.broadcast %20 : vector<1x256xf32> to vector<16x256xf32>
    %22 = arith.addf %19, %21 : vector<16x256xf32>
    %cst_17 = arith.constant 0.000000e+00 : f32
    %23 = vector.broadcast %cst_17 : f32 to vector<16x256xf32>
    %24 = arith.maximumf %22, %23 : vector<16x256xf32>
    %25 = arith.truncf %24 : vector<16x256xf32> to vector<16x256xbf16>
    %c0_18 = arith.constant 0 : index
    %c0_19 = arith.constant 0 : index
    %26 = vector.load %arg8[%c0_18, %c0_19] : memref<256x128xbf16, #tpu.memory_space<vmem>>, vector<256x128xbf16>
    %cst_20 = arith.constant dense<0.000000e+00> : vector<16x128xf32>
    %27 = tpu.matmul %25, %26, %cst_20 {dimension_numbers = #tpu.dot_dimension_numbers<[1], [0], [0], [1], [0, 0, 1, 1], [], []>} : vector<16x256xbf16>, vector<256x128xbf16>, vector<16x128xf32> -> vector<16x128xf32>
    %c0_21 = arith.constant 0 : index
    %c0_22 = arith.constant 0 : index
    %28 = vector.load %arg9[%c0_21, %c0_22] : memref<1x128xf32, #tpu.memory_space<vmem>>, vector<1x128xf32>
    %29 = vector.broadcast %28 : vector<1x128xf32> to vector<16x128xf32>
    %30 = arith.addf %27, %29 : vector<16x128xf32>
    %cst_23 = arith.constant 0.000000e+00 : f32
    %31 = vector.broadcast %cst_23 : f32 to vector<16x128xf32>
    %32 = arith.maximumf %30, %31 : vector<16x128xf32>
    %33 = arith.truncf %32 : vector<16x128xf32> to vector<16x128xbf16>
    %c0_24 = arith.constant 0 : index
    %c0_25 = arith.constant 0 : index
    %34 = vector.load %arg10[%c0_24, %c0_25] : memref<128x128xbf16, #tpu.memory_space<vmem>>, vector<128x128xbf16>
    %cst_26 = arith.constant dense<0.000000e+00> : vector<16x128xf32>
    %35 = tpu.matmul %33, %34, %cst_26 {dimension_numbers = #tpu.dot_dimension_numbers<[1], [0], [0], [1], [0, 0, 1, 1], [], []>} : vector<16x128xbf16>, vector<128x128xbf16>, vector<16x128xf32> -> vector<16x128xf32>
    %c0_27 = arith.constant 0 : index
    %c0_28 = arith.constant 0 : index
    %36 = vector.load %arg11[%c0_27, %c0_28] : memref<1x128xf32, #tpu.memory_space<vmem>>, vector<1x128xf32>
    %37 = vector.broadcast %36 : vector<1x128xf32> to vector<16x128xf32>
    %38 = arith.addf %35, %37 : vector<16x128xf32>
    %c0_29 = arith.constant 0 : index
    %c0_30 = arith.constant 0 : index
    %39 = vector.load %arg12[%c0_29, %c0_30] : memref<16x128xf32, #tpu.memory_space<vmem>>, vector<16x128xf32>
    tpu.vector_store %arg12[%c0_29, %c0_30], %38 {strides = array<i32>} : memref<16x128xf32, #tpu.memory_space<vmem>>, vector<16x128xf32>,
    return
  }
  func.func @transform_0(%arg0: i32) -> (i32, i32) {
    %c0_i32 = arith.constant 0 : i32
    %c0_i32_0 = arith.constant 0 : i32
    return %arg0, %c0_i32 : i32, i32
  }
  func.func @transform_1(%arg0: i32) -> (i32, i32) {
    %c0_i32 = arith.constant 0 : i32
    %c0_i32_0 = arith.constant 0 : i32
    %c0_i32_1 = arith.constant 0 : i32
    return %c0_i32, %c0_i32_0 : i32, i32
  }
  func.func @transform_2(%arg0: i32) -> (i32, i32) {
    %c0_i32 = arith.constant 0 : i32
    %c0_i32_0 = arith.constant 0 : i32
    %c0_i32_1 = arith.constant 0 : i32
    return %c0_i32, %c0_i32_0 : i32, i32
  }
  func.func @transform_3(%arg0: i32) -> (i32, i32) {
    %c0_i32 = arith.constant 0 : i32
    %c0_i32_0 = arith.constant 0 : i32
    %c0_i32_1 = arith.constant 0 : i32
    return %c0_i32, %c0_i32_0 : i32, i32
  }
  func.func @transform_4(%arg0: i32) -> (i32, i32) {
    %c0_i32 = arith.constant 0 : i32
    %c0_i32_0 = arith.constant 0 : i32
    %c0_i32_1 = arith.constant 0 : i32
    return %c0_i32, %c0_i32_0 : i32, i32
  }
  func.func @transform_5(%arg0: i32) -> (i32, i32) {
    %c0_i32 = arith.constant 0 : i32
    %c0_i32_0 = arith.constant 0 : i32
    %c0_i32_1 = arith.constant 0 : i32
    return %c0_i32, %c0_i32_0 : i32, i32
  }
  func.func @transform_6(%arg0: i32) -> (i32, i32) {
    %c0_i32 = arith.constant 0 : i32
    %c0_i32_0 = arith.constant 0 : i32
    %c0_i32_1 = arith.constant 0 : i32
    return %c0_i32, %c0_i32_0 : i32, i32
  }
  func.func @transform_7(%arg0: i32) -> (i32, i32) {
    %c0_i32 = arith.constant 0 : i32
    %c0_i32_0 = arith.constant 0 : i32
    %c0_i32_1 = arith.constant 0 : i32
    return %c0_i32, %c0_i32_0 : i32, i32
  }
  func.func @transform_8(%arg0: i32) -> (i32, i32) {
    %c0_i32 = arith.constant 0 : i32
    %c0_i32_0 = arith.constant 0 : i32
    %c0_i32_1 = arith.constant 0 : i32
    return %c0_i32, %c0_i32_0 : i32, i32
  }
  func.func @transform_9(%arg0: i32) -> (i32, i32) {
    %c0_i32 = arith.constant 0 : i32
    %c0_i32_0 = arith.constant 0 : i32
    %c0_i32_1 = arith.constant 0 : i32
    return %c0_i32, %c0_i32_0 : i32, i32
  }
  func.func @transform_10(%arg0: i32) -> (i32, i32) {
    %c0_i32 = arith.constant 0 : i32
    %c0_i32_0 = arith.constant 0 : i32
    %c0_i32_1 = arith.constant 0 : i32
    return %c0_i32, %c0_i32_0 : i32, i32
  }
  func.func @transform_11(%arg0: i32) -> (i32, i32) {
    %c0_i32 = arith.constant 0 : i32
    %c0_i32_0 = arith.constant 0 : i32
    return %arg0, %c0_i32 : i32, i32
  }
}

</mosaic_0001>

<llo_original>
// kernel: tpu_custom_call.1
$region0: #{tpu_custom_call.1}
  #allocation0 [shape = 'u32[]', space=smem, size = 0x4, offset = 0x4, fixed_abs, tag = 'smem constant byte address 0x4 - core index']
  #allocation1 [shape = 'u32[144,128]{1,0:T(1,128)}', space=vmem, size = 0x12000, scoped, tag = 'internal scratch']
  %s0 = inlined_call_operand.hbm [shape: f32[16,256], index: 0, kind: input, shape index: {}]
  %s1 = inlined_call_operand.hbm [shape: bf16[256,128], index: 1, kind: input, shape index: {}]
  %s2 = inlined_call_operand.vmem [shape: f32[1,128], index: 2, kind: input, shape index: {}]
  %s3 = inlined_call_operand.hbm [shape: bf16[128,256], index: 3, kind: input, shape index: {}]
  %s4 = inlined_call_operand.vmem [shape: f32[1,256], index: 4, kind: input, shape index: {}]
  %s5 = inlined_call_operand.hbm [shape: bf16[256,256], index: 5, kind: input, shape index: {}]
  %s6 = inlined_call_operand.vmem [shape: f32[1,256], index: 6, kind: input, shape index: {}]
  %s7 = inlined_call_operand.hbm [shape: bf16[256,128], index: 7, kind: input, shape index: {}]
  %s8 = inlined_call_operand.vmem [shape: f32[1,128], index: 8, kind: input, shape index: {}]
  %s9 = inlined_call_operand.hbm [shape: bf16[128,128], index: 9, kind: input, shape index: {}]
  %s10 = inlined_call_operand.vmem [shape: f32[1,128], index: 10, kind: input, shape index: {}]
  %s11 = inlined_call_operand.hbm [shape: f32[16,128], index: 11, kind: output, shape index: {}]
  %s12 = sld [smem:[#allocation0]]
  $region78: #{tpu_custom_call.1} parent=0
    _
  %s14 = ssub.s32 1, %s12
  %s15 = scalar_select 0, %s14, %s12
  $region1: #{tpu_custom_call.1} parent=0
    #allocation2 [shape = 'u8[16384]{0}', space=vmem, size = 0x4000, scoped, tag = 'input window, operand 0, single buffered']
    #allocation3 [shape = 's32[1]{0}', space=sflag, size = 0x4, scoped, tag = 'scoped memory for tpu_custom_call.1']
    #allocation4 [shape = 's32[1]{0}', space=sflag, size = 0x4, scoped, tag = 'scoped memory for tpu_custom_call.1']
    #allocation5 [shape = 'u8[65536]{0}', space=vmem, size = 0x10000, scoped, tag = 'input window, operand 1, single buffered']
    #allocation6 [shape = 's32[1]{0}', space=sflag, size = 0x4, scoped, tag = 'scoped memory for tpu_custom_call.1']
    #allocation7 [shape = 'u8[65536]{0}', space=vmem, size = 0x10000, scoped, tag = 'input window, operand 3, single buffered']
    #allocation8 [shape = 'u8[131072]{0}', space=vmem, size = 0x20000, scoped, tag = 'input window, operand 5, single buffered']
    #allocation9 [shape = 's32[1]{0}', space=sflag, size = 0x4, scoped, tag = 'scoped memory for tpu_custom_call.1']
    #allocation10 [shape = 'u8[65536]{0}', space=vmem, size = 0x10000, scoped, tag = 'input window, operand 7, single buffered']
    #allocation11 [shape = 'u8[32768]{0}', space=vmem, size = 0x8000, scoped, tag = 'input window, operand 9, single buffered']
    #allocation12 [shape = 's32[1]{0}', space=sflag, size = 0x4, scoped, tag = 'scoped memory for tpu_custom_call.1']
    #allocation13 [shape = 'u8[8192]{0}', space=vmem, size = 0x2000, scoped, tag = 'output window, operand 0, single buffered']
    %16 = vsyncpa [#allocation3], 0
    %17 = vsyncpa [#allocation6], 0
    %18 = vsyncpa [#allocation9], 0
    %19 = vsyncpa [#allocation12], 0
    %20 = vsyncpa [#allocation4], 0
    // Predicated region
    $region2: #{tpu_custom_call.1} parent=1 // pred_check
      _
    $region3: #{tpu_custom_call.1} parent=1 // pred_check_branch
      %22 = sbr.rel (0) target = $region5
    $region4: #{tpu_custom_call.1} parent=1 // pred_region
      %s24 = ssub.s32 512, 512
      %25 = vsyncadd [#allocation3], %s24
      %s26 = sshll.u32 [#allocation2], 4
      %s27 = int_to_ptr.vmem [resolvable:$true] %s26
      %32 = dma.hbm_to_vmem [thread:$0]  %s0, 512, %s27, [#allocation3], 256, 256, 16
    $region5: #{tpu_custom_call.1} parent=1 // pred_fallthru
      _
    // Predicated region
    $region6: #{tpu_custom_call.1} parent=1 // pred_check
      _
    $region7: #{tpu_custom_call.1} parent=1 // pred_check_branch
      %34 = sbr.rel (0) target = $region9
    $region8: #{tpu_custom_call.1} parent=1 // pred_region
      %s36 = ssub.s32 2048, 2048
      %37 = vsyncadd [#allocation6], %s36
      %s38 = sshll.u32 [#allocation5], 4
      %s39 = int_to_ptr.vmem [resolvable:$true] %s38
      %44 = dma.hbm_to_vmem [thread:$0]  %s1, 2048, %s39, [#allocation6], 64, 64, 4
    $region9: #{tpu_custom_call.1} parent=1 // pred_fallthru
      _
    // Predicated region
    $region10: #{tpu_custom_call.1} parent=1 // pred_check
      _
    $region11: #{tpu_custom_call.1} parent=1 // pred_check_branch
      %46 = sbr.rel (0) target = $region13
    $region12: #{tpu_custom_call.1} parent=1 // pred_region
      _
    $region13: #{tpu_custom_call.1} parent=1 // pred_fallthru
      _
    // Predicated region
    $region14: #{tpu_custom_call.1} parent=1 // pred_check
      _
    $region15: #{tpu_custom_call.1} parent=1 // pred_check_branch
      %48 = sbr.rel (0) target = $region17
    $region16: #{tpu_custom_call.1} parent=1 // pred_region
      %s50 = ssub.s32 2048, 2048
      %51 = vsyncadd [#allocation6], %s50
      %s52 = sshll.u32 [#allocation7], 4
      %s53 = int_to_ptr.vmem [resolvable:$true] %s52
      %58 = dma.hbm_to_vmem [thread:$0]  %s3, 2048, %s53, [#allocation6], 128, 128, 8
    $region17: #{tpu_custom_call.1} parent=1 // pred_fallthru
      _
    // Predicated region
    $region18: #{tpu_custom_call.1} parent=1 // pred_check
      _
    $region19: #{tpu_custom_call.1} parent=1 // pred_check_branch
      %60 = sbr.rel (0) target = $region21
    $region20: #{tpu_custom_call.1} parent=1 // pred_region
      _
    $region21: #{tpu_custom_call.1} parent=1 // pred_fallthru
      _
    // Predicated region
    $region22: #{tpu_custom_call.1} parent=1 // pred_check
      _
    $region23: #{tpu_custom_call.1} parent=1 // pred_check_branch
      %62 = sbr.rel (0) target = $region25
    $region24: #{tpu_custom_call.1} parent=1 // pred_region
      %s64 = ssub.s32 4096, 4096
      %65 = vsyncadd [#allocation9], %s64
      %s66 = sshll.u32 [#allocation8], 4
      %s67 = int_to_ptr.vmem [resolvable:$true] %s66
      %72 = dma.hbm_to_vmem [thread:$0]  %s5, 4096, %s67, [#allocation9], 128, 128, 8
    $region25: #{tpu_custom_call.1} parent=1 // pred_fallthru
      _
    // Predicated region
    $region26: #{tpu_custom_call.1} parent=1 // pred_check
      _
    $region27: #{tpu_custom_call.1} parent=1 // pred_check_branch
      %74 = sbr.rel (0) target = $region29
    $region28: #{tpu_custom_call.1} parent=1 // pred_region
      _
    $region29: #{tpu_custom_call.1} parent=1 // pred_fallthru
      _
    // Predicated region
    $region30: #{tpu_custom_call.1} parent=1 // pred_check
      _
    $region31: #{tpu_custom_call.1} parent=1 // pred_check_branch
      %76 = sbr.rel (0) target = $region33
    $region32: #{tpu_custom_call.1} parent=1 // pred_region
      %s78 = ssub.s32 2048, 2048
      %79 = vsyncadd [#allocation9], %s78
      %s80 = sshll.u32 [#allocation10], 4
      %s81 = int_to_ptr.vmem [resolvable:$true] %s80
      %86 = dma.hbm_to_vmem [thread:$0]  %s7, 2048, %s81, [#allocation9], 64, 64, 4
    $region33: #{tpu_custom_call.1} parent=1 // pred_fallthru
      _
    // Predicated region
    $region34: #{tpu_custom_call.1} parent=1 // pred_check
      _
    $region35: #{tpu_custom_call.1} parent=1 // pred_check_branch
      %88 = sbr.rel (0) target = $region37
    $region36: #{tpu_custom_call.1} parent=1 // pred_region
      _
    $region37: #{tpu_custom_call.1} parent=1 // pred_fallthru
      _
    // Predicated region
    $region38: #{tpu_custom_call.1} parent=1 // pred_check
      _
    $region39: #{tpu_custom_call.1} parent=1 // pred_check_branch
      %90 = sbr.rel (0) target = $region41
    $region40: #{tpu_custom_call.1} parent=1 // pred_region
      %s92 = ssub.s32 1024, 1024
      %93 = vsyncadd [#allocation12], %s92
      %s94 = sshll.u32 [#allocation11], 4
      %s95 = int_to_ptr.vmem [resolvable:$true] %s94
      %100 = dma.hbm_to_vmem [thread:$0]  %s9, 1024, %s95, [#allocation12], 64, 64, 4
    $region41: #{tpu_custom_call.1} parent=1 // pred_fallthru
      _
    // Predicated region
    $region42: #{tpu_custom_call.1} parent=1 // pred_check
      _
    $region43: #{tpu_custom_call.1} parent=1 // pred_check_branch
      %102 = sbr.rel (0) target = $region45
    $region44: #{tpu_custom_call.1} parent=1 // pred_region
      _
    $region45: #{tpu_custom_call.1} parent=1 // pred_fallthru
      _
    // Predicated region
    $region46: #{tpu_custom_call.1} parent=1 // pred_check
      _
    $region47: #{tpu_custom_call.1} parent=1 // pred_check_branch
      %104 = sbr.rel (0) target = $region49
    $region48: #{tpu_custom_call.1} parent=1 // pred_region
      %105 = dma.done [#allocation3], 512
    $region49: #{tpu_custom_call.1} parent=1 // pred_fallthru
      _
    // Predicated region
    $region50: #{tpu_custom_call.1} parent=1 // pred_check
      _
    $region51: #{tpu_custom_call.1} parent=1 // pred_check_branch
      %107 = sbr.rel (0) target = $region53
    $region52: #{tpu_custom_call.1} parent=1 // pred_region
      %108 = dma.done [#allocation6], 2048
    $region53: #{tpu_custom_call.1} parent=1 // pred_fallthru
      _
    // Predicated region
    $region54: #{tpu_custom_call.1} parent=1 // pred_check
      _
    $region55: #{tpu_custom_call.1} parent=1 // pred_check_branch
      %110 = sbr.rel (0) target = $region57
    $region56: #{tpu_custom_call.1} parent=1 // pred_region
      %111 = dma.done [#allocation6], 2048
    $region57: #{tpu_custom_call.1} parent=1 // pred_fallthru
      _
    // Predicated region
    $region58: #{tpu_custom_call.1} parent=1 // pred_check
      _
    $region59: #{tpu_custom_call.1} parent=1 // pred_check_branch
      %113 = sbr.rel (0) target = $region61
    $region60: #{tpu_custom_call.1} parent=1 // pred_region
      %114 = dma.done [#allocation9], 4096
    $region61: #{tpu_custom_call.1} parent=1 // pred_fallthru
      _
    // Predicated region
    $region62: #{tpu_custom_call.1} parent=1 // pred_check
      _
    $region63: #{tpu_custom_call.1} parent=1 // pred_check_branch
      %116 = sbr.rel (0) target = $region65
    $region64: #{tpu_custom_call.1} parent=1 // pred_region
      %117 = dma.done [#allocation9], 2048
    $region65: #{tpu_custom_call.1} parent=1 // pred_fallthru
      _
    // Predicated region
    $region66: #{tpu_custom_call.1} parent=1 // pred_check
      _
    $region67: #{tpu_custom_call.1} parent=1 // pred_check_branch
      %119 = sbr.rel (0) target = $region69
    $region68: #{tpu_custom_call.1} parent=1 // pred_region
      %120 = dma.done [#allocation12], 1024
    $region69: #{tpu_custom_call.1} parent=1 // pred_fallthru
      _
    %v122 = vld [vmem:[#allocation2] sm:$0xff]
    %v123 = vld [vmem:[#allocation2 + $0x8] sm:$0xff]
    %v124 = vld [vmem:[#allocation2 + $0x10] sm:$0xff]
    %v125 = vld [vmem:[#allocation2 + $0x18] sm:$0xff]
    %v126 = vpack.c.bf16 %v124, %v122
    %v127 = vpack.c.bf16 %v125, %v123
    %v128 = vld [vmem:[#allocation5] sm:$0xf]
    %v129 = vld [vmem:[#allocation5 + $0x4] sm:$0xf]
    %v130 = vld [vmem:[#allocation5 + $0x8] sm:$0xf]
    %v131 = vld [vmem:[#allocation5 + $0xc] sm:$0xf]
    %v132 = vld [vmem:[#allocation5 + $0x10] sm:$0xf]
    %v133 = vld [vmem:[#allocation5 + $0x14] sm:$0xf]
    %v134 = vld [vmem:[#allocation5 + $0x18] sm:$0xf]
    %v135 = vld [vmem:[#allocation5 + $0x1c] sm:$0xf]
    %v136 = vld [vmem:[#allocation5 + $0x20] sm:$0xf]
    %v137 = vld [vmem:[#allocation5 + $0x24] sm:$0xf]
    %v138 = vld [vmem:[#allocation5 + $0x28] sm:$0xf]
    %v139 = vld [vmem:[#allocation5 + $0x2c] sm:$0xf]
    %v140 = vld [vmem:[#allocation5 + $0x30] sm:$0xf]
    %v141 = vld [vmem:[#allocation5 + $0x34] sm:$0xf]
    %v142 = vld [vmem:[#allocation5 + $0x38] sm:$0xf]
    %v143 = vld [vmem:[#allocation5 + $0x3c] sm:$0xf]
    %v144 = vld [vmem:[#allocation5 + $0x40] sm:$0xf]
    %v145 = vld [vmem:[#allocation5 + $0x44] sm:$0xf]
    %v146 = vld [vmem:[#allocation5 + $0x48] sm:$0xf]
    %v147 = vld [vmem:[#allocation5 + $0x4c] sm:$0xf]
    %v148 = vld [vmem:[#allocation5 + $0x50] sm:$0xf]
    %v149 = vld [vmem:[#allocation5 + $0x54] sm:$0xf]
    %v150 = vld [vmem:[#allocation5 + $0x58] sm:$0xf]
    %v151 = vld [vmem:[#allocation5 + $0x5c] sm:$0xf]
    %v152 = vld [vmem:[#allocation5 + $0x60] sm:$0xf]
    %v153 = vld [vmem:[#allocation5 + $0x64] sm:$0xf]
    %v154 = vld [vmem:[#allocation5 + $0x68] sm:$0xf]
    %v155 = vld [vmem:[#allocation5 + $0x6c] sm:$0xf]
    %v156 = vld [vmem:[#allocation5 + $0x70] sm:$0xf]
    %v157 = vld [vmem:[#allocation5 + $0x74] sm:$0xf]
    %v158 = vld [vmem:[#allocation5 + $0x78] sm:$0xf]
    %v159 = vld [vmem:[#allocation5 + $0x7c] sm:$0xf]
    %v160 = vld [vmem:[%s2] sm:$0x1]
    %v162 = vlaneseq
    %v163 = vshrl.u32 %v162, 7
    %v164 = vsub.s32 0, %v163
    %v165 = vrot.slane %v160, %v164
    %v199 = vunpack.c.l.b16 %v128
    %v200 = vunpack.c.l.b16 %v129
    %v201 = vunpack.c.l.b16 %v130
    %v202 = vunpack.c.l.b16 %v131
    %v203 = vunpack.c.l.b16 %v132
    %v204 = vunpack.c.l.b16 %v133
    %v205 = vunpack.c.l.b16 %v134
    %v206 = vunpack.c.l.b16 %v135
    %v207 = vunpack.c.l.b16 %v136
    %v208 = vunpack.c.l.b16 %v137
    %v209 = vunpack.c.l.b16 %v138
    %v210 = vunpack.c.l.b16 %v139
    %v211 = vunpack.c.l.b16 %v140
    %v212 = vunpack.c.l.b16 %v141
    %v213 = vunpack.c.l.b16 %v142
    %v214 = vunpack.c.l.b16 %v143
    %v215 = vunpack.c.l.b16 %v144
    %v216 = vunpack.c.l.b16 %v145
    %v217 = vunpack.c.l.b16 %v146
    %v218 = vunpack.c.l.b16 %v147
    %v219 = vunpack.c.l.b16 %v148
    %v220 = vunpack.c.l.b16 %v149
    %v221 = vunpack.c.l.b16 %v150
    %v222 = vunpack.c.l.b16 %v151
    %v223 = vunpack.c.l.b16 %v152
    %v224 = vunpack.c.l.b16 %v153
    %v225 = vunpack.c.l.b16 %v154
    %v226 = vunpack.c.l.b16 %v155
    %v227 = vunpack.c.l.b16 %v156
    %v228 = vunpack.c.l.b16 %v157
    %v229 = vunpack.c.l.b16 %v158
    %v230 = vunpack.c.l.b16 %v159
    %v231 = vpack.c.b16 %v200, %v199
    %v232 = vpack.c.b16 %v202, %v201
    %v233 = vpack.c.b16 %v204, %v203
    %v234 = vpack.c.b16 %v206, %v205
    %v235 = vpack.c.b16 %v208, %v207
    %v236 = vpack.c.b16 %v210, %v209
    %v237 = vpack.c.b16 %v212, %v211
    %v238 = vpack.c.b16 %v214, %v213
    %v239 = vpack.c.b16 %v216, %v215
    %v240 = vpack.c.b16 %v218, %v217
    %v241 = vpack.c.b16 %v220, %v219
    %v242 = vpack.c.b16 %v222, %v221
    %v243 = vpack.c.b16 %v224, %v223
    %v244 = vpack.c.b16 %v226, %v225
    %v245 = vpack.c.b16 %v228, %v227
    %v246 = vpack.c.b16 %v230, %v229
    %263 = vmatprep.subr.bf16.mxu0 0
    %264 = vmatpush1.bf16.msra.mxu0 %v231
    %265 = vmatprep.subr.bf16.mxu0 0
    %266 = vmatpush1.bf16.msra.mxu0 %v232
    %267 = vmatprep.subr.bf16.mxu0 0
    %268 = vmatpush1.bf16.msra.mxu0 %v233
    %269 = vmatprep.subr.bf16.mxu0 0
    %270 = vmatpush1.bf16.msra.mxu0 %v234
    %271 = vmatprep.subr.bf16.mxu0 0
    %272 = vmatpush1.bf16.msra.mxu0 %v235
    %273 = vmatprep.subr.bf16.mxu0 0
    %274 = vmatpush1.bf16.msra.mxu0 %v236
    %275 = vmatprep.subr.bf16.mxu0 0
    %276 = vmatpush1.bf16.msra.mxu0 %v237
    %277 = vmatprep.subr.bf16.mxu0 0
    %278 = vmatpush1.bf16.msra.mxu0 %v238
    %279 = vmatprep.subr.bf16.mxu0 0
    %280 = vmatpush1.bf16.msra.mxu0 %v239
    %281 = vmatprep.subr.bf16.mxu0 0
    %282 = vmatpush1.bf16.msra.mxu0 %v240
    %283 = vmatprep.subr.bf16.mxu0 0
    %284 = vmatpush1.bf16.msra.mxu0 %v241
    %285 = vmatprep.subr.bf16.mxu0 0
    %286 = vmatpush1.bf16.msra.mxu0 %v242
    %287 = vmatprep.subr.bf16.mxu0 0
    %288 = vmatpush1.bf16.msra.mxu0 %v243
    %289 = vmatprep.subr.bf16.mxu0 0
    %290 = vmatpush1.bf16.msra.mxu0 %v244
    %291 = vmatprep.subr.bf16.mxu0 0
    %292 = vmatpush1.bf16.msra.mxu0 %v245
    %293 = vmatprep.subr.bf16.mxu0 0
    %294 = vmatpush1.bf16.msra.mxu0 %v246
    %295 = vmatprep.mubr.bf16.mxu0 %v127
    %296 = vmatmul.mubr.bf16.gmra.mrb[0].mxu0 %v126
    %v297 = vpop.f32.mrb[0].mxu0
    %v298 = vadd.f32 %v165, %v297
    %v299 = vpop.f32.mrb[0].mxu0
    %v300 = vpop.f32.mrb[0].mxu0
    %v301 = vadd.f32 %v165, %v300
    %v302 = vpop.f32.mrb[0].mxu0
    %303 = vdwg.mxu0
    %v304 = vmax.f32 %v298, 0.0
    %v305 = vmax.f32 %v301, 0.0
    %v306 = vpack.c.bf16 %v305, %v304
    %v307 = vld [vmem:[#allocation7] sm:$0xff]
    %v308 = vld [vmem:[#allocation7 + $0x8] sm:$0xff]
    %v309 = vld [vmem:[#allocation7 + $0x10] sm:$0xff]
    %v310 = vld [vmem:[#allocation7 + $0x18] sm:$0xff]
    %v311 = vld [vmem:[#allocation7 + $0x20] sm:$0xff]
    %v312 = vld [vmem:[#allocation7 + $0x28] sm:$0xff]
    %v313 = vld [vmem:[#allocation7 + $0x30] sm:$0xff]
    %v314 = vld [vmem:[#allocation7 + $0x38] sm:$0xff]
    %v315 = vld [vmem:[#allocation7 + $0x40] sm:$0xff]
    %v316 = vld [vmem:[#allocation7 + $0x48] sm:$0xff]
    %v317 = vld [vmem:[#allocation7 + $0x50] sm:$0xff]
    %v318 = vld [vmem:[#allocation7 + $0x58] sm:$0xff]
    %v319 = vld [vmem:[#allocation7 + $0x60] sm:$0xff]
    %v320 = vld [vmem:[#allocation7 + $0x68] sm:$0xff]
    %v321 = vld [vmem:[#allocation7 + $0x70] sm:$0xff]
    %v322 = vld [vmem:[#allocation7 + $0x78] sm:$0xff]
    %v323 = vld [vmem:[%s4] sm:$0x3]
    %v325 = vlaneseq
    %v326 = vshrl.u32 %v325, 7
    %v327 = vsub.s32 0, %v326
    %v328 = vrot.slane %v323, %v327
    %v329 = vlaneseq
    %v330 = vshrl.u32 %v329, 7
    %v331 = vsub.s32 1, %v330
    %v332 = vrot.slane %v323, %v331
    %v351 = vunpack.c.l.b16 %v307
    %v352 = vunpack.c.h.b16 %v307
    %v353 = vunpack.c.l.b16 %v308
    %v354 = vunpack.c.h.b16 %v308
    %v355 = vunpack.c.l.b16 %v309
    %v356 = vunpack.c.h.b16 %v309
    %v357 = vunpack.c.l.b16 %v310
    %v358 = vunpack.c.h.b16 %v310
    %v359 = vunpack.c.l.b16 %v311
    %v360 = vunpack.c.h.b16 %v311
    %v361 = vunpack.c.l.b16 %v312
    %v362 = vunpack.c.h.b16 %v312
    %v363 = vunpack.c.l.b16 %v313
    %v364 = vunpack.c.h.b16 %v313
    %v365 = vunpack.c.l.b16 %v314
    %v366 = vunpack.c.h.b16 %v314
    %v367 = vunpack.c.l.b16 %v315
    %v368 = vunpack.c.h.b16 %v315
    %v369 = vunpack.c.l.b16 %v316
    %v370 = vunpack.c.h.b16 %v316
    %v371 = vunpack.c.l.b16 %v317
    %v372 = vunpack.c.h.b16 %v317
    %v373 = vunpack.c.l.b16 %v318
    %v374 = vunpack.c.h.b16 %v318
    %v375 = vunpack.c.l.b16 %v319
    %v376 = vunpack.c.h.b16 %v319
    %v377 = vunpack.c.l.b16 %v320
    %v378 = vunpack.c.h.b16 %v320
    %v379 = vunpack.c.l.b16 %v321
    %v380 = vunpack.c.h.b16 %v321
    %v381 = vunpack.c.l.b16 %v322
    %v382 = vunpack.c.h.b16 %v322
    %v383 = vpack.c.b16 %v353, %v351
    %v384 = vpack.c.b16 %v354, %v352
    %v385 = vpack.c.b16 %v357, %v355
    %v386 = vpack.c.b16 %v358, %v356
    %v387 = vpack.c.b16 %v361, %v359
    %v388 = vpack.c.b16 %v362, %v360
    %v389 = vpack.c.b16 %v365, %v363
    %v390 = vpack.c.b16 %v366, %v364
    %v391 = vpack.c.b16 %v369, %v367
    %v392 = vpack.c.b16 %v370, %v368
    %v393 = vpack.c.b16 %v373, %v371
    %v394 = vpack.c.b16 %v374, %v372
    %v395 = vpack.c.b16 %v377, %v375
    %v396 = vpack.c.b16 %v378, %v376
    %v397 = vpack.c.b16 %v381, %v379
    %v398 = vpack.c.b16 %v382, %v380
    %415 = vmatprep.subr.bf16.mxu0 %v384
    %416 = vmatpush1.bf16.msra.mxu0 %v383
    %417 = vmatprep.subr.bf16.mxu0 %v386
    %418 = vmatpush1.bf16.msra.mxu0 %v385
    %419 = vmatprep.subr.bf16.mxu0 %v388
    %420 = vmatpush1.bf16.msra.mxu0 %v387
    %421 = vmatprep.subr.bf16.mxu0 %v390
    %422 = vmatpush1.bf16.msra.mxu0 %v389
    %423 = vmatprep.subr.bf16.mxu0 %v392
    %424 = vmatpush1.bf16.msra.mxu0 %v391
    %425 = vmatprep.subr.bf16.mxu0 %v394
    %426 = vmatpush1.bf16.msra.mxu0 %v393
    %427 = vmatprep.subr.bf16.mxu0 %v396
    %428 = vmatpush1.bf16.msra.mxu0 %v395
    %429 = vmatprep.subr.bf16.mxu0 %v398
    %430 = vmatpush1.bf16.msra.mxu0 %v397
    %431 = vmatprep.subr.bf16.mxu0 0
    %432 = vmatpush1.bf16.msra.mxu0 0
    %433 = vmatprep.subr.bf16.mxu0 0
    %434 = vmatpush1.bf16.msra.mxu0 0
    %435 = vmatprep.subr.bf16.mxu0 0
    %436 = vmatpush1.bf16.msra.mxu0 0
    %437 = vmatprep.subr.bf16.mxu0 0
    %438 = vmatpush1.bf16.msra.mxu0 0
    %439 = vmatprep.subr.bf16.mxu0 0
    %440 = vmatpush1.bf16.msra.mxu0 0
    %441 = vmatprep.subr.bf16.mxu0 0
    %442 = vmatpush1.bf16.msra.mxu0 0
    %443 = vmatprep.subr.bf16.mxu0 0
    %444 = vmatpush1.bf16.msra.mxu0 0
    %445 = vmatprep.subr.bf16.mxu0 0
    %446 = vmatpush1.bf16.msra.mxu0 0
    %447 = vmatprep.mubr.bf16.mxu0 0
    %448 = vmatmul.mubr.bf16.gmra.mrb[0].mxu0 %v306
    %v449 = vpop.f32.mrb[0].mxu0
    %v450 = vadd.f32 %v328, %v449
    %v451 = vpop.f32.mrb[0].mxu0
    %v452 = vadd.f32 %v332, %v451
    %v453 = vpop.f32.mrb[0].mxu0
    %v454 = vadd.f32 %v328, %v453
    %v455 = vpop.f32.mrb[0].mxu0
    %v456 = vadd.f32 %v332, %v455
    %457 = vdwg.mxu0
    %v458 = vmax.f32 %v450, 0.0
    %v459 = vmax.f32 %v452, 0.0
    %v460 = vmax.f32 %v454, 0.0
    %v461 = vmax.f32 %v456, 0.0
    %v462 = vpack.c.bf16 %v460, %v458
    %v463 = vpack.c.bf16 %v461, %v459
    %v464 = vld [vmem:[#allocation8] sm:$0xff]
    %v465 = vld [vmem:[#allocation8 + $0x8] sm:$0xff]
    %v466 = vld [vmem:[#allocation8 + $0x10] sm:$0xff]
    %v467 = vld [vmem:[#allocation8 + $0x18] sm:$0xff]
    %v468 = vld [vmem:[#allocation8 + $0x20] sm:$0xff]
    %v469 = vld [vmem:[#allocation8 + $0x28] sm:$0xff]
    %v470 = vld [vmem:[#allocation8 + $0x30] sm:$0xff]
    %v471 = vld [vmem:[#allocation8 + $0x38] sm:$0xff]
    %v472 = vld [vmem:[#allocation8 + $0x40] sm:$0xff]
    %v473 = vld [vmem:[#allocation8 + $0x48] sm:$0xff]
    %v474 = vld [vmem:[#allocation8 + $0x50] sm:$0xff]
    %v475 = vld [vmem:[#allocation8 + $0x58] sm:$0xff]
    %v476 = vld [vmem:[#allocation8 + $0x60] sm:$0xff]
    %v477 = vld [vmem:[#allocation8 + $0x68] sm:$0xff]
    %v478 = vld [vmem:[#allocation8 + $0x70] sm:$0xff]
    %v479 = vld [vmem:[#allocation8 + $0x78] sm:$0xff]
    %v480 = vld [vmem:[#allocation8 + $0x80] sm:$0xff]
    %v481 = vld [vmem:[#allocation8 + $0x88] sm:$0xff]
    %v482 = vld [vmem:[#allocation8 + $0x90] sm:$0xff]
    %v483 = vld [vmem:[#allocation8 + $0x98] sm:$0xff]
    %v484 = vld [vmem:[#allocation8 + $0xa0] sm:$0xff]
    %v485 = vld [vmem:[#allocation8 + $0xa8] sm:$0xff]
    %v486 = vld [vmem:[#allocation8 + $0xb0] sm:$0xff]
    %v487 = vld [vmem:[#allocation8 + $0xb8] sm:$0xff]
    %v488 = vld [vmem:[#allocation8 + $0xc0] sm:$0xff]
    %v489 = vld [vmem:[#allocation8 + $0xc8] sm:$0xff]
    %v490 = vld [vmem:[#allocation8 + $0xd0] sm:$0xff]
    %v491 = vld [vmem:[#allocation8 + $0xd8] sm:$0xff]
    %v492 = vld [vmem:[#allocation8 + $0xe0] sm:$0xff]
    %v493 = vld [vmem:[#allocation8 + $0xe8] sm:$0xff]
    %v494 = vld [vmem:[#allocation8 + $0xf0] sm:$0xff]
    %v495 = vld [vmem:[#allocation8 + $0xf8] sm:$0xff]
    %v496 = vld [vmem:[%s6] sm:$0x3]
    %v498 = vlaneseq
    %v499 = vshrl.u32 %v498, 7
    %v500 = vsub.s32 0, %v499
    %v501 = vrot.slane %v496, %v500
    %v502 = vlaneseq
    %v503 = vshrl.u32 %v502, 7
    %v504 = vsub.s32 1, %v503
    %v505 = vrot.slane %v496, %v504
    %v540 = vunpack.c.l.b16 %v464
    %v541 = vunpack.c.h.b16 %v464
    %v542 = vunpack.c.l.b16 %v465
    %v543 = vunpack.c.h.b16 %v465
    %v544 = vunpack.c.l.b16 %v466
    %v545 = vunpack.c.h.b16 %v466
    %v546 = vunpack.c.l.b16 %v467
    %v547 = vunpack.c.h.b16 %v467
    %v548 = vunpack.c.l.b16 %v468
    %v549 = vunpack.c.h.b16 %v468
    %v550 = vunpack.c.l.b16 %v469
    %v551 = vunpack.c.h.b16 %v469
    %v552 = vunpack.c.l.b16 %v470
    %v553 = vunpack.c.h.b16 %v470
    %v554 = vunpack.c.l.b16 %v471
    %v555 = vunpack.c.h.b16 %v471
    %v556 = vunpack.c.l.b16 %v472
    %v557 = vunpack.c.h.b16 %v472
    %v558 = vunpack.c.l.b16 %v473
    %v559 = vunpack.c.h.b16 %v473
    %v560 = vunpack.c.l.b16 %v474
    %v561 = vunpack.c.h.b16 %v474
    %v562 = vunpack.c.l.b16 %v475
    %v563 = vunpack.c.h.b16 %v475
    %v564 = vunpack.c.l.b16 %v476
    %v565 = vunpack.c.h.b16 %v476
    %v566 = vunpack.c.l.b16 %v477
    %v567 = vunpack.c.h.b16 %v477
    %v568 = vunpack.c.l.b16 %v478
    %v569 = vunpack.c.h.b16 %v478
    %v570 = vunpack.c.l.b16 %v479
    %v571 = vunpack.c.h.b16 %v479
    %v572 = vunpack.c.l.b16 %v480
    %v573 = vunpack.c.h.b16 %v480
    %v574 = vunpack.c.l.b16 %v481
    %v575 = vunpack.c.h.b16 %v481
    %v576 = vunpack.c.l.b16 %v482
    %v577 = vunpack.c.h.b16 %v482
    %v578 = vunpack.c.l.b16 %v483
    %v579 = vunpack.c.h.b16 %v483
    %v580 = vunpack.c.l.b16 %v484
    %v581 = vunpack.c.h.b16 %v484
    %v582 = vunpack.c.l.b16 %v485
    %v583 = vunpack.c.h.b16 %v485
    %v584 = vunpack.c.l.b16 %v486
    %v585 = vunpack.c.h.b16 %v486
    %v586 = vunpack.c.l.b16 %v487
    %v587 = vunpack.c.h.b16 %v487
    %v588 = vunpack.c.l.b16 %v488
    %v589 = vunpack.c.h.b16 %v488
    %v590 = vunpack.c.l.b16 %v489
    %v591 = vunpack.c.h.b16 %v489
    %v592 = vunpack.c.l.b16 %v490
    %v593 = vunpack.c.h.b16 %v490
    %v594 = vunpack.c.l.b16 %v491
    %v595 = vunpack.c.h.b16 %v491
    %v596 = vunpack.c.l.b16 %v492
    %v597 = vunpack.c.h.b16 %v492
    %v598 = vunpack.c.l.b16 %v493
    %v599 = vunpack.c.h.b16 %v493
    %v600 = vunpack.c.l.b16 %v494
    %v601 = vunpack.c.h.b16 %v494
    %v602 = vunpack.c.l.b16 %v495
    %v603 = vunpack.c.h.b16 %v495
    %v604 = vpack.c.b16 %v542, %v540
    %v605 = vpack.c.b16 %v543, %v541
    %v606 = vpack.c.b16 %v546, %v544
    %v607 = vpack.c.b16 %v547, %v545
    %v608 = vpack.c.b16 %v550, %v548
    %v609 = vpack.c.b16 %v551, %v549
    %v610 = vpack.c.b16 %v554, %v552
    %v611 = vpack.c.b16 %v555, %v553
    %v612 = vpack.c.b16 %v558, %v556
    %v613 = vpack.c.b16 %v559, %v557
    %v614 = vpack.c.b16 %v562, %v560
    %v615 = vpack.c.b16 %v563, %v561
    %v616 = vpack.c.b16 %v566, %v564
    %v617 = vpack.c.b16 %v567, %v565
    %v618 = vpack.c.b16 %v570, %v568
    %v619 = vpack.c.b16 %v571, %v569
    %v620 = vpack.c.b16 %v574, %v572
    %v621 = vpack.c.b16 %v575, %v573
    %v622 = vpack.c.b16 %v578, %v576
    %v623 = vpack.c.b16 %v579, %v577
    %v624 = vpack.c.b16 %v582, %v580
    %v625 = vpack.c.b16 %v583, %v581
    %v626 = vpack.c.b16 %v586, %v584
    %v627 = vpack.c.b16 %v587, %v585
    %v628 = vpack.c.b16 %v590, %v588
    %v629 = vpack.c.b16 %v591, %v589
    %v630 = vpack.c.b16 %v594, %v592
    %v631 = vpack.c.b16 %v595, %v593
    %v632 = vpack.c.b16 %v598, %v596
    %v633 = vpack.c.b16 %v599, %v597
    %v634 = vpack.c.b16 %v602, %v600
    %v635 = vpack.c.b16 %v603, %v601
    %668 = vmatprep.subr.bf16.mxu0 %v605
    %669 = vmatpush1.bf16.msra.mxu0 %v604
    %670 = vmatprep.subr.bf16.mxu0 %v607
    %671 = vmatpush1.bf16.msra.mxu0 %v606
    %672 = vmatprep.subr.bf16.mxu0 %v609
    %673 = vmatpush1.bf16.msra.mxu0 %v608
    %674 = vmatprep.subr.bf16.mxu0 %v611
    %675 = vmatpush1.bf16.msra.mxu0 %v610
    %676 = vmatprep.subr.bf16.mxu0 %v613
    %677 = vmatpush1.bf16.msra.mxu0 %v612
    %678 = vmatprep.subr.bf16.mxu0 %v615
    %679 = vmatpush1.bf16.msra.mxu0 %v614
    %680 = vmatprep.subr.bf16.mxu0 %v617
    %681 = vmatpush1.bf16.msra.mxu0 %v616
    %682 = vmatprep.subr.bf16.mxu0 %v619
    %683 = vmatpush1.bf16.msra.mxu0 %v618
    %684 = vmatprep.subr.bf16.mxu0 %v621
    %685 = vmatpush1.bf16.msra.mxu0 %v620
    %686 = vmatprep.subr.bf16.mxu0 %v623
    %687 = vmatpush1.bf16.msra.mxu0 %v622
    %688 = vmatprep.subr.bf16.mxu0 %v625
    %689 = vmatpush1.bf16.msra.mxu0 %v624
    %690 = vmatprep.subr.bf16.mxu0 %v627
    %691 = vmatpush1.bf16.msra.mxu0 %v626
    %692 = vmatprep.subr.bf16.mxu0 %v629
    %693 = vmatpush1.bf16.msra.mxu0 %v628
    %694 = vmatprep.subr.bf16.mxu0 %v631
    %695 = vmatpush1.bf16.msra.mxu0 %v630
    %696 = vmatprep.subr.bf16.mxu0 %v633
    %697 = vmatpush1.bf16.msra.mxu0 %v632
    %698 = vmatprep.subr.bf16.mxu0 %v635
    %699 = vmatpush1.bf16.msra.mxu0 %v634
    %700 = vmatprep.mubr.bf16.mxu0 %v463
    %701 = vmatmul.mubr.bf16.gmra.mrb[0].mxu0 %v462
    %v702 = vpop.f32.mrb[0].mxu0
    %v703 = vadd.f32 %v501, %v702
    %v704 = vpop.f32.mrb[0].mxu0
    %v705 = vadd.f32 %v505, %v704
    %v706 = vpop.f32.mrb[0].mxu0
    %v707 = vadd.f32 %v501, %v706
    %v708 = vpop.f32.mrb[0].mxu0
    %v709 = vadd.f32 %v505, %v708
    %710 = vdwg.mxu0
    %v711 = vmax.f32 %v703, 0.0
    %v712 = vmax.f32 %v705, 0.0
    %v713 = vmax.f32 %v707, 0.0
    %v714 = vmax.f32 %v709, 0.0
    %v715 = vpack.c.bf16 %v713, %v711
    %v716 = vpack.c.bf16 %v714, %v712
    %v717 = vld [vmem:[#allocation10] sm:$0xf]
    %v718 = vld [vmem:[#allocation10 + $0x4] sm:$0xf]
    %v719 = vld [vmem:[#allocation10 + $0x8] sm:$0xf]
    %v720 = vld [vmem:[#allocation10 + $0xc] sm:$0xf]
    %v721 = vld [vmem:[#allocation10 + $0x10] sm:$0xf]
    %v722 = vld [vmem:[#allocation10 + $0x14] sm:$0xf]
    %v723 = vld [vmem:[#allocation10 + $0x18] sm:$0xf]
    %v724 = vld [vmem:[#allocation10 + $0x1c] sm:$0xf]
    %v725 = vld [vmem:[#allocation10 + $0x20] sm:$0xf]
    %v726 = vld [vmem:[#allocation10 + $0x24] sm:$0xf]
    %v727 = vld [vmem:[#allocation10 + $0x28] sm:$0xf]
    %v728 = vld [vmem:[#allocation10 + $0x2c] sm:$0xf]
    %v729 = vld [vmem:[#allocation10 + $0x30] sm:$0xf]
    %v730 = vld [vmem:[#allocation10 + $0x34] sm:$0xf]
    %v731 = vld [vmem:[#allocation10 + $0x38] sm:$0xf]
    %v732 = vld [vmem:[#allocation10 + $0x3c] sm:$0xf]
    %v733 = vld [vmem:[#allocation10 + $0x40] sm:$0xf]
    %v734 = vld [vmem:[#allocation10 + $0x44] sm:$0xf]
    %v735 = vld [vmem:[#allocation10 + $0x48] sm:$0xf]
    %v736 = vld [vmem:[#allocation10 + $0x4c] sm:$0xf]
    %v737 = vld [vmem:[#allocation10 + $0x50] sm:$0xf]
    %v738 = vld [vmem:[#allocation10 + $0x54] sm:$0xf]
    %v739 = vld [vmem:[#allocation10 + $0x58] sm:$0xf]
    %v740 = vld [vmem:[#allocation10 + $0x5c] sm:$0xf]
    %v741 = vld [vmem:[#allocation10 + $0x60] sm:$0xf]
    %v742 = vld [vmem:[#allocation10 + $0x64] sm:$0xf]
    %v743 = vld [vmem:[#allocation10 + $0x68] sm:$0xf]
    %v744 = vld [vmem:[#allocation10 + $0x6c] sm:$0xf]
    %v745 = vld [vmem:[#allocation10 + $0x70] sm:$0xf]
    %v746 = vld [vmem:[#allocation10 + $0x74] sm:$0xf]
    %v747 = vld [vmem:[#allocation10 + $0x78] sm:$0xf]
    %v748 = vld [vmem:[#allocation10 + $0x7c] sm:$0xf]
    %v749 = vld [vmem:[%s8] sm:$0x1]
    %v751 = vlaneseq
    %v752 = vshrl.u32 %v751, 7
    %v753 = vsub.s32 0, %v752
    %v754 = vrot.slane %v749, %v753
    %v788 = vunpack.c.l.b16 %v717
    %v789 = vunpack.c.l.b16 %v718
    %v790 = vunpack.c.l.b16 %v719
    %v791 = vunpack.c.l.b16 %v720
    %v792 = vunpack.c.l.b16 %v721
    %v793 = vunpack.c.l.b16 %v722
    %v794 = vunpack.c.l.b16 %v723
    %v795 = vunpack.c.l.b16 %v724
    %v796 = vunpack.c.l.b16 %v725
    %v797 = vunpack.c.l.b16 %v726
    %v798 = vunpack.c.l.b16 %v727
    %v799 = vunpack.c.l.b16 %v728
    %v800 = vunpack.c.l.b16 %v729
    %v801 = vunpack.c.l.b16 %v730
    %v802 = vunpack.c.l.b16 %v731
    %v803 = vunpack.c.l.b16 %v732
    %v804 = vunpack.c.l.b16 %v733
    %v805 = vunpack.c.l.b16 %v734
    %v806 = vunpack.c.l.b16 %v735
    %v807 = vunpack.c.l.b16 %v736
    %v808 = vunpack.c.l.b16 %v737
    %v809 = vunpack.c.l.b16 %v738
    %v810 = vunpack.c.l.b16 %v739
    %v811 = vunpack.c.l.b16 %v740
    %v812 = vunpack.c.l.b16 %v741
    %v813 = vunpack.c.l.b16 %v742
    %v814 = vunpack.c.l.b16 %v743
    %v815 = vunpack.c.l.b16 %v744
    %v816 = vunpack.c.l.b16 %v745
    %v817 = vunpack.c.l.b16 %v746
    %v818 = vunpack.c.l.b16 %v747
    %v819 = vunpack.c.l.b16 %v748
    %v820 = vpack.c.b16 %v789, %v788
    %v821 = vpack.c.b16 %v791, %v790
    %v822 = vpack.c.b16 %v793, %v792
    %v823 = vpack.c.b16 %v795, %v794
    %v824 = vpack.c.b16 %v797, %v796
    %v825 = vpack.c.b16 %v799, %v798
    %v826 = vpack.c.b16 %v801, %v800
    %v827 = vpack.c.b16 %v803, %v802
    %v828 = vpack.c.b16 %v805, %v804
    %v829 = vpack.c.b16 %v807, %v806
    %v830 = vpack.c.b16 %v809, %v808
    %v831 = vpack.c.b16 %v811, %v810
    %v832 = vpack.c.b16 %v813, %v812
    %v833 = vpack.c.b16 %v815, %v814
    %v834 = vpack.c.b16 %v817, %v816
    %v835 = vpack.c.b16 %v819, %v818
    %852 = vmatprep.subr.bf16.mxu0 0
    %853 = vmatpush1.bf16.msra.mxu0 %v820
    %854 = vmatprep.subr.bf16.mxu0 0
    %855 = vmatpush1.bf16.msra.mxu0 %v821
    %856 = vmatprep.subr.bf16.mxu0 0
    %857 = vmatpush1.bf16.msra.mxu0 %v822
    %858 = vmatprep.subr.bf16.mxu0 0
    %859 = vmatpush1.bf16.msra.mxu0 %v823
    %860 = vmatprep.subr.bf16.mxu0 0
    %861 = vmatpush1.bf16.msra.mxu0 %v824
    %862 = vmatprep.subr.bf16.mxu0 0
    %863 = vmatpush1.bf16.msra.mxu0 %v825
    %864 = vmatprep.subr.bf16.mxu0 0
    %865 = vmatpush1.bf16.msra.mxu0 %v826
    %866 = vmatprep.subr.bf16.mxu0 0
    %867 = vmatpush1.bf16.msra.mxu0 %v827
    %868 = vmatprep.subr.bf16.mxu0 0
    %869 = vmatpush1.bf16.msra.mxu0 %v828
    %870 = vmatprep.subr.bf16.mxu0 0
    %871 = vmatpush1.bf16.msra.mxu0 %v829
    %872 = vmatprep.subr.bf16.mxu0 0
    %873 = vmatpush1.bf16.msra.mxu0 %v830
    %874 = vmatprep.subr.bf16.mxu0 0
    %875 = vmatpush1.bf16.msra.mxu0 %v831
    %876 = vmatprep.subr.bf16.mxu0 0
    %877 = vmatpush1.bf16.msra.mxu0 %v832
    %878 = vmatprep.subr.bf16.mxu0 0
    %879 = vmatpush1.bf16.msra.mxu0 %v833
    %880 = vmatprep.subr.bf16.mxu0 0
    %881 = vmatpush1.bf16.msra.mxu0 %v834
    %882 = vmatprep.subr.bf16.mxu0 0
    %883 = vmatpush1.bf16.msra.mxu0 %v835
    %884 = vmatprep.mubr.bf16.mxu0 %v716
    %885 = vmatmul.mubr.bf16.gmra.mrb[0].mxu0 %v715
    %v886 = vpop.f32.mrb[0].mxu0
    %v887 = vadd.f32 %v754, %v886
    %v888 = vpop.f32.mrb[0].mxu0
    %v889 = vpop.f32.mrb[0].mxu0
    %v890 = vadd.f32 %v754, %v889
    %v891 = vpop.f32.mrb[0].mxu0
    %892 = vdwg.mxu0
    %v893 = vmax.f32 %v887, 0.0
    %v894 = vmax.f32 %v890, 0.0
    %v895 = vpack.c.bf16 %v894, %v893
    %v896 = vld [vmem:[#allocation11] sm:$0xf]
    %v897 = vld [vmem:[#allocation11 + $0x4] sm:$0xf]
    %v898 = vld [vmem:[#allocation11 + $0x8] sm:$0xf]
    %v899 = vld [vmem:[#allocation11 + $0xc] sm:$0xf]
    %v900 = vld [vmem:[#allocation11 + $0x10] sm:$0xf]
    %v901 = vld [vmem:[#allocation11 + $0x14] sm:$0xf]
    %v902 = vld [vmem:[#allocation11 + $0x18] sm:$0xf]
    %v903 = vld [vmem:[#allocation11 + $0x1c] sm:$0xf]
    %v904 = vld [vmem:[#allocation11 + $0x20] sm:$0xf]
    %v905 = vld [vmem:[#allocation11 + $0x24] sm:$0xf]
    %v906 = vld [vmem:[#allocation11 + $0x28] sm:$0xf]
    %v907 = vld [vmem:[#allocation11 + $0x2c] sm:$0xf]
    %v908 = vld [vmem:[#allocation11 + $0x30] sm:$0xf]
    %v909 = vld [vmem:[#allocation11 + $0x34] sm:$0xf]
    %v910 = vld [vmem:[#allocation11 + $0x38] sm:$0xf]
    %v911 = vld [vmem:[#allocation11 + $0x3c] sm:$0xf]
    %v912 = vld [vmem:[%s10] sm:$0x1]
    %v914 = vlaneseq
    %v915 = vshrl.u32 %v914, 7
    %v916 = vsub.s32 0, %v915
    %v917 = vrot.slane %v912, %v916
    %v935 = vunpack.c.l.b16 %v896
    %v936 = vunpack.c.l.b16 %v897
    %v937 = vunpack.c.l.b16 %v898
    %v938 = vunpack.c.l.b16 %v899
    %v939 = vunpack.c.l.b16 %v900
    %v940 = vunpack.c.l.b16 %v901
    %v941 = vunpack.c.l.b16 %v902
    %v942 = vunpack.c.l.b16 %v903
    %v943 = vunpack.c.l.b16 %v904
    %v944 = vunpack.c.l.b16 %v905
    %v945 = vunpack.c.l.b16 %v906
    %v946 = vunpack.c.l.b16 %v907
    %v947 = vunpack.c.l.b16 %v908
    %v948 = vunpack.c.l.b16 %v909
    %v949 = vunpack.c.l.b16 %v910
    %v950 = vunpack.c.l.b16 %v911
    %v951 = vpack.c.b16 %v936, %v935
    %v952 = vpack.c.b16 %v938, %v937
    %v953 = vpack.c.b16 %v940, %v939
    %v954 = vpack.c.b16 %v942, %v941
    %v955 = vpack.c.b16 %v944, %v943
    %v956 = vpack.c.b16 %v946, %v945
    %v957 = vpack.c.b16 %v948, %v947
    %v958 = vpack.c.b16 %v950, %v949
    %967 = vmatprep.subr.bf16.mxu0 0
    %968 = vmatpush1.bf16.msra.mxu0 %v951
    %969 = vmatprep.subr.bf16.mxu0 0
    %970 = vmatpush1.bf16.msra.mxu0 %v952
    %971 = vmatprep.subr.bf16.mxu0 0
    %972 = vmatpush1.bf16.msra.mxu0 %v953
    %973 = vmatprep.subr.bf16.mxu0 0
    %974 = vmatpush1.bf16.msra.mxu0 %v954
    %975 = vmatprep.subr.bf16.mxu0 0
    %976 = vmatpush1.bf16.msra.mxu0 %v955
    %977 = vmatprep.subr.bf16.mxu0 0
    %978 = vmatpush1.bf16.msra.mxu0 %v956
    %979 = vmatprep.subr.bf16.mxu0 0
    %980 = vmatpush1.bf16.msra.mxu0 %v957
    %981 = vmatprep.subr.bf16.mxu0 0
    %982 = vmatpush1.bf16.msra.mxu0 %v958
    %983 = vmatprep.subr.bf16.mxu0 0
    %984 = vmatpush1.bf16.msra.mxu0 0
    %985 = vmatprep.subr.bf16.mxu0 0
    %986 = vmatpush1.bf16.msra.mxu0 0
    %987 = vmatprep.subr.bf16.mxu0 0
    %988 = vmatpush1.bf16.msra.mxu0 0
    %989 = vmatprep.subr.bf16.mxu0 0
    %990 = vmatpush1.bf16.msra.mxu0 0
    %991 = vmatprep.subr.bf16.mxu0 0
    %992 = vmatpush1.bf16.msra.mxu0 0
    %993 = vmatprep.subr.bf16.mxu0 0
    %994 = vmatpush1.bf16.msra.mxu0 0
    %995 = vmatprep.subr.bf16.mxu0 0
    %996 = vmatpush1.bf16.msra.mxu0 0
    %997 = vmatprep.subr.bf16.mxu0 0
    %998 = vmatpush1.bf16.msra.mxu0 0
    %999 = vmatprep.mubr.bf16.mxu0 0
    %1000 = vmatmul.mubr.bf16.gmra.mrb[0].mxu0 %v895
    %v1001 = vpop.f32.mrb[0].mxu0
    %v1002 = vadd.f32 %v917, %v1001
    %v1003 = vpop.f32.mrb[0].mxu0
    %v1004 = vpop.f32.mrb[0].mxu0
    %v1005 = vadd.f32 %v917, %v1004
    %v1006 = vpop.f32.mrb[0].mxu0
    %1007 = vdwg.mxu0
    %1008 = vst [vmem:[#allocation13] sm:$0xff] %v1002
    %1009 = vst [vmem:[#allocation13 + $0x8] sm:$0xff] %v1005
    // Predicated region
    $region70: #{tpu_custom_call.1} parent=1 // pred_check
      _
    $region71: #{tpu_custom_call.1} parent=1 // pred_check_branch
      %1011 = sbr.rel (0) target = $region73
    $region72: #{tpu_custom_call.1} parent=1 // pred_region
      %s1013 = ssub.s32 256, 256
      %1014 = vsyncadd [#allocation4], %s1013
      %s1015 = sshll.u32 [#allocation13], 4
      %s1016 = int_to_ptr.vmem [resolvable:$true] %s1015
      %1021 = dma.vmem_to_hbm [thread:$0]  %s1016, 256, %s11, [#allocation4], 128, 128, 8
    $region73: #{tpu_custom_call.1} parent=1 // pred_fallthru
      _
    // Predicated region
    $region74: #{tpu_custom_call.1} parent=1 // pred_check
      _
    $region75: #{tpu_custom_call.1} parent=1 // pred_check_branch
      %1023 = sbr.rel (0) target = $region77
    $region76: #{tpu_custom_call.1} parent=1 // pred_region
      %1024 = dma.done [#allocation4], 256
    $region77: #{tpu_custom_call.1} parent=1 // pred_fallthru
      _
    %1025 = vsyncpa [#allocation3], 1
    %1026 = vsyncpa [#allocation6], 1
    %1027 = vsyncpa [#allocation9], 1
    %1028 = vsyncpa [#allocation12], 1
    %1029 = vsyncpa [#allocation4], 1

</llo_original>
